<compile_context>
chip_gen: v6e
topology: v6e:2x2x1
jax: 0.10.0
libtpu: 0.0.40
codegen_flags: <defaults>
</compile_context>

<pallas_src>
import jax
import jax.numpy as jnp
from jax.experimental import pallas as pl
from jax.experimental.pallas import tpu as pltpu

LANES = 512  # lane-dense last dim (multiple of 128)


def _ganloss_partial_kernel(x_ref, t_ref, psum_ref):
    # Per-block partial sum of squared differences, kept lane-shaped so the
    # expensive cross-lane reduction happens only once, outside the kernel.
    x = x_ref[...].astype(jnp.float32)
    t = t_ref[...].astype(jnp.float32)
    diff = x - t
    psum_ref[0, :, :] = jnp.sum(diff * diff, axis=0, keepdims=True)


def gan_loss_forward(x_nchw, target_nchw, weight):
    """Returns (input passthrough, scalar loss = MSE(input, target) * weight)."""
    assert x_nchw.shape == target_nchw.shape
    numel = x_nchw.size
    dtype_bytes = jnp.dtype(x_nchw.dtype).itemsize

    # --- choose tiling: rows of LANES, tile ~1 MiB per input buffer ---------
    rows = pl.cdiv(numel, LANES)
    rows_rounded = ((rows + 7) // 8) * 8                       # sublane multiple
    max_tile_rows = max(8, ((1 << 20) // (LANES * dtype_bytes) // 8) * 8)
    tile_r = max(8, min(rows_rounded, max_tile_rows))          # multiple of 8
    rows_padded = pl.cdiv(rows, tile_r) * tile_r
    padded_numel = rows_padded * LANES
    num_blocks = rows_padded // tile_r

    # --- lane-dense layout, zero-padded (zeros contribute 0 to the loss) ----
    x_flat = x_nchw.reshape(-1)
    t_flat = target_nchw.reshape(-1)
    if padded_numel != numel:
        pad = padded_numel - numel
        x_flat = jnp.pad(x_flat, (0, pad))
        t_flat = jnp.pad(t_flat, (0, pad))
    x2d = x_flat.reshape(rows_padded, LANES)
    t2d = t_flat.reshape(rows_padded, LANES)

    partials = pl.pallas_call(
        _ganloss_partial_kernel,
        out_shape=jax.ShapeDtypeStruct((num_blocks, 1, LANES), jnp.float32),
        grid=(num_blocks,),
        in_specs=[
            pl.BlockSpec((tile_r, LANES), lambda i: (i, 0)),
            pl.BlockSpec((tile_r, LANES), lambda i: (i, 0)),
        ],
        out_specs=pl.BlockSpec((1, 1, LANES), lambda i: (i, 0, 0)),
        compiler_params=pltpu.CompilerParams(
            dimension_semantics=("parallel",),
        ),
        cost_estimate=pl.CostEstimate(
            flops=3 * padded_numel,
            transcendentals=0,
            bytes_accessed=2 * padded_numel * dtype_bytes + num_blocks * LANES * 4,
        ),
    )(x2d, t2d)

    # Final tiny reduction + scaling in plain JAX; weight may vary at runtime
    # without triggering a Pallas recompile.
    loss = jnp.sum(partials) * (jnp.asarray(weight, jnp.float32) / numel)

    # forward() returns its input unchanged: no copy, no extra HBM traffic.
    return x_nchw, loss


if __name__ == "__main__":
    # Small shapes consistent with an NCHW GAN feature map.
    N, C, H, W = 2, 4, 16, 16
    key = jax.random.PRNGKey(0)
    k_in, k_tg, k_mask = jax.random.split(key, 3)

    x = jax.random.normal(k_in, (N, C, H, W), dtype=jnp.float32)
    # Deterministic "module parameters" from __init__ (target, mask, weight).
    target = jax.random.normal(k_tg, (N, C, H, W), dtype=jnp.float32)
    mask = (jax.random.uniform(k_mask, (N, C, H, W)) > 0.5).astype(jnp.float32)  # unused in forward
    weight = 0.5

    out, loss = gan_loss_forward(x, target, weight)
    out = jax.block_until_ready(out)
    loss = jax.block_until_ready(loss)

    # Reference check in plain JAX.
    ref_loss = jnp.mean((x - target) ** 2) * weight
    assert jnp.allclose(out, x), "forward must return input unchanged"
    assert jnp.allclose(loss, ref_loss, rtol=1e-5, atol=1e-6), (loss, ref_loss)

    # TODO(synk): gan_hook (gradient masking) is a backward hook, not part of the
    # forward pass; implement via jax.custom_vjp if gradients are needed.
    print("KERNEL_OK")
</pallas_src>

<mosaic_0001>
module attributes {stable_mosaic.version = 11 : i64} {
  func.func @_ganloss_partial_kernel(%arg0: i32, %arg1: memref<8x512xf32, #tpu.memory_space<vmem>>, %arg2: memref<8x512xf32, #tpu.memory_space<vmem>>, %arg3: memref<1x1x512xf32, #tpu.memory_space<vmem>>) attributes {dimension_semantics = [#tpu.dimension_semantics<parallel>], iteration_bounds = array<i64: 1>, scalar_prefetch = 0 : i64, scratch_operands = 0 : i64, tpu.core_type = #tpu.core_type<tc>, window_params = [{transform_indices = @transform_0, window_bounds = array<i64: 8, 512>}, {transform_indices = @transform_1, window_bounds = array<i64: 8, 512>}, {transform_indices = @transform_2, window_bounds = array<i64: 1, 1, 512>}]} {
    %c0 = arith.constant 0 : index
    %c0_0 = arith.constant 0 : index
    %0 = vector.load %arg1[%c0, %c0_0] : memref<8x512xf32, #tpu.memory_space<vmem>>, vector<8x512xf32>
    %c0_1 = arith.constant 0 : index
    %c0_2 = arith.constant 0 : index
    %1 = vector.load %arg2[%c0_1, %c0_2] : memref<8x512xf32, #tpu.memory_space<vmem>>, vector<8x512xf32>
    %2 = arith.subf %0, %1 : vector<8x512xf32>
    %3 = arith.mulf %2, %2 : vector<8x512xf32>
    %cst = arith.constant dense<0.000000e+00> : vector<512xf32>
    %4 = vector.multi_reduction <add>, %3, %cst [0] : vector<8x512xf32> to vector<512xf32>
    %5 = vector.shape_cast %4 : vector<512xf32> to vector<1x512xf32>
    %c0_3 = arith.constant 0 : index
    %c0_4 = arith.constant 0 : index
    %c0_5 = arith.constant 0 : index
    %6 = vector.load %arg3[%c0_3, %c0_4, %c0_5] : memref<1x1x512xf32, #tpu.memory_space<vmem>>, vector<1x1x512xf32>
    %7 = vector.shape_cast %6 : vector<1x1x512xf32> to vector<1x512xf32>
    %8 = vector.shape_cast %5 : vector<1x512xf32> to vector<1x1x512xf32>
    tpu.vector_store %arg3[%c0_3, %c0_4, %c0_5], %8 {strides = array<i32>} : memref<1x1x512xf32, #tpu.memory_space<vmem>>, vector<1x1x512xf32>,
    return
  }
  func.func @transform_0(%arg0: i32) -> (i32, i32) {
    %c0_i32 = arith.constant 0 : i32
    %c0_i32_0 = arith.constant 0 : i32
    return %arg0, %c0_i32 : i32, i32
  }
  func.func @transform_1(%arg0: i32) -> (i32, i32) {
    %c0_i32 = arith.constant 0 : i32
    %c0_i32_0 = arith.constant 0 : i32
    return %arg0, %c0_i32 : i32, i32
  }
  func.func @transform_2(%arg0: i32) -> (i32, i32, i32) {
    %c0_i32 = arith.constant 0 : i32
    %c0_i32_0 = arith.constant 0 : i32
    %c0_i32_1 = arith.constant 0 : i32
    return %arg0, %c0_i32, %c0_i32_0 : i32, i32, i32
  }
}

</mosaic_0001>

<llo_original>
// kernel: tpu_custom_call.1
$region0: #{tpu_custom_call.1}
  #allocation0 [shape = 'u32[]', space=smem, size = 0x4, offset = 0x4, fixed_abs, tag = 'smem constant byte address 0x4 - core index']
  #allocation1 [shape = 'u32[144,128]{1,0:T(1,128)}', space=vmem, size = 0x12000, scoped, tag = 'internal scratch']
  %s0 = inlined_call_operand.hbm [shape: f32[8,512], index: 0, kind: input, shape index: {}]
  %s1 = inlined_call_operand.hbm [shape: f32[8,512], index: 1, kind: input, shape index: {}]
  %s2 = inlined_call_operand.hbm [shape: f32[1,1,512], index: 2, kind: output, shape index: {}]
  %s3 = sld [smem:[#allocation0]]
  $region26: #{tpu_custom_call.1} parent=0
    _
  %s5 = ssub.s32 1, %s3
  %s6 = scalar_select 0, %s5, %s3
  $region1: #{tpu_custom_call.1} parent=0
    #allocation2 [shape = 'u8[16384]{0}', space=vmem, size = 0x4000, scoped, tag = 'input window, operand 0, single buffered']
    #allocation3 [shape = 's32[1]{0}', space=sflag, size = 0x4, scoped, tag = 'scoped memory for tpu_custom_call.1']
    #allocation4 [shape = 's32[1]{0}', space=sflag, size = 0x4, scoped, tag = 'scoped memory for tpu_custom_call.1']
    #allocation5 [shape = 'u8[16384]{0}', space=vmem, size = 0x4000, scoped, tag = 'input window, operand 1, single buffered']
    #allocation6 [shape = 's32[1]{0}', space=sflag, size = 0x4, scoped, tag = 'scoped memory for tpu_custom_call.1']
    #allocation7 [shape = 'u8[2048]{0}', space=vmem, size = 0x800, scoped, tag = 'output window, operand 0, single buffered']
    %7 = vsyncpa [#allocation3], 0
    %8 = vsyncpa [#allocation6], 0
    %9 = vsyncpa [#allocation4], 0
    // Predicated region
    $region2: #{tpu_custom_call.1} parent=1 // pred_check
      _
    $region3: #{tpu_custom_call.1} parent=1 // pred_check_branch
      %11 = sbr.rel (0) target = $region5
    $region4: #{tpu_custom_call.1} parent=1 // pred_region
      %s13 = ssub.s32 512, 512
      %14 = vsyncadd [#allocation3], %s13
      %s16 = sshll.u32 [#allocation2], 4
      %s17 = int_to_ptr.vmem [resolvable:$true] %s16
      %19 = dma.hbm_to_vmem [thread:$0]  %s0, 512, %s17, [#allocation3]
    $region5: #{tpu_custom_call.1} parent=1 // pred_fallthru
      _
    // Predicated region
    $region6: #{tpu_custom_call.1} parent=1 // pred_check
      _
    $region7: #{tpu_custom_call.1} parent=1 // pred_check_branch
      %21 = sbr.rel (0) target = $region9
    $region8: #{tpu_custom_call.1} parent=1 // pred_region
      %s23 = ssub.s32 512, 512
      %24 = vsyncadd [#allocation6], %s23
      %s26 = sshll.u32 [#allocation5], 4
      %s27 = int_to_ptr.vmem [resolvable:$true] %s26
      %29 = dma.hbm_to_vmem [thread:$0]  %s1, 512, %s27, [#allocation6]
    $region9: #{tpu_custom_call.1} parent=1 // pred_fallthru
      _
    // Predicated region
    $region10: #{tpu_custom_call.1} parent=1 // pred_check
      _
    $region11: #{tpu_custom_call.1} parent=1 // pred_check_branch
      %31 = sbr.rel (0) target = $region13
    $region12: #{tpu_custom_call.1} parent=1 // pred_region
      %32 = dma.done [#allocation3], 512
    $region13: #{tpu_custom_call.1} parent=1 // pred_fallthru
      _
    // Predicated region
    $region14: #{tpu_custom_call.1} parent=1 // pred_check
      _
    $region15: #{tpu_custom_call.1} parent=1 // pred_check_branch
      %34 = sbr.rel (0) target = $region17
    $region16: #{tpu_custom_call.1} parent=1 // pred_region
      %35 = dma.done [#allocation6], 512
    $region17: #{tpu_custom_call.1} parent=1 // pred_fallthru
      _
    %v36 = vld [vmem:[#allocation2] sm:$0xff]
    %v37 = vld [vmem:[#allocation2 + $0x8] sm:$0xff]
    %v38 = vld [vmem:[#allocation2 + $0x10] sm:$0xff]
    %v39 = vld [vmem:[#allocation2 + $0x18] sm:$0xff]
    %v40 = vld [vmem:[#allocation5] sm:$0xff]
    %v41 = vld [vmem:[#allocation5 + $0x8] sm:$0xff]
    %v42 = vld [vmem:[#allocation5 + $0x10] sm:$0xff]
    %v43 = vld [vmem:[#allocation5 + $0x18] sm:$0xff]
    %v44 = vsub.f32 %v36, %v40
    %v45 = vsub.f32 %v37, %v41
    %v46 = vsub.f32 %v38, %v42
    %v47 = vsub.f32 %v39, %v43
    %v48 = vmul.f32 %v44, %v44
    %v49 = vmul.f32 %v45, %v45
    %v50 = vmul.f32 %v46, %v46
    %v51 = vmul.f32 %v47, %v47
    %v52 = vrot.slane %v48, 4
    %v53 = vadd.f32 %v48, %v52
    %v54 = vrot.slane %v53, 2
    %v55 = vadd.f32 %v53, %v54
    %v56 = vrot.slane %v55, 1
    %v57 = vadd.f32 %v55, %v56
    %v58 = vrot.slane %v49, 4
    %v59 = vadd.f32 %v49, %v58
    %v60 = vrot.slane %v59, 2
    %v61 = vadd.f32 %v59, %v60
    %v62 = vrot.slane %v61, 1
    %v63 = vadd.f32 %v61, %v62
    %v64 = vrot.slane %v50, 4
    %v65 = vadd.f32 %v50, %v64
    %v66 = vrot.slane %v65, 2
    %v67 = vadd.f32 %v65, %v66
    %v68 = vrot.slane %v67, 1
    %v69 = vadd.f32 %v67, %v68
    %v70 = vrot.slane %v51, 4
    %v71 = vadd.f32 %v51, %v70
    %v72 = vrot.slane %v71, 2
    %v73 = vadd.f32 %v71, %v72
    %v74 = vrot.slane %v73, 1
    %v75 = vadd.f32 %v73, %v74
    %v80 = vcombine.low %v57, %v63
    %v81 = vcombine.low %v69, %v75
    %v83 = vunpack.c.l.s4 1966171168
    %v84 = vunpack.c.0.s8 %v83
    %v85 = vlaneseq
    %v86 = vshrl.u32 %v85, 7
    %v87 = vsub.s32 %v84, %v86
    %v88 = vrot.slane %v80, %v87
    %v90 = vunpack.c.l.s4 1966171168
    %v91 = vunpack.c.0.s8 %v90
    %v92 = vlaneseq
    %v93 = vshrl.u32 %v92, 7
    %v94 = vsub.s32 %v91, %v93
    %v95 = vrot.slane %v81, %v94
    %v96 = vcombine.low %v88, %v95
    %v98 = vunpack.c.l.s4 1966171168
    %v99 = vunpack.c.0.s8 %v98
    %v100 = vlaneseq
    %v101 = vshrl.u32 %v100, 7
    %v102 = vsub.s32 %v99, %v101
    %v103 = vrot.slane %v96, %v102
    %v105 = vlaneseq
    %vm106 = vcmp.ge.s32.totalorder %v105, 0
    %vm107 = vcmp.lt.s32.totalorder %v105, 512
    %vm108 = vmand %vm106, %vm107
    %109 = vst.msk [vmem:[#allocation7] sm:$0xf] %vm108, %v103
    // Predicated region
    $region18: #{tpu_custom_call.1} parent=1 // pred_check
      _
    $region19: #{tpu_custom_call.1} parent=1 // pred_check_branch
      %111 = sbr.rel (0) target = $region21
    $region20: #{tpu_custom_call.1} parent=1 // pred_region
      %s113 = ssub.s32 64, 64
      %114 = vsyncadd [#allocation4], %s113
      %s116 = sshll.u32 [#allocation7], 4
      %s117 = int_to_ptr.vmem [resolvable:$true] %s116
      %119 = dma.vmem_to_hbm [thread:$0]  %s117, 64, %s2, [#allocation4]
    $region21: #{tpu_custom_call.1} parent=1 // pred_fallthru
      _
    // Predicated region
    $region22: #{tpu_custom_call.1} parent=1 // pred_check
      _
    $region23: #{tpu_custom_call.1} parent=1 // pred_check_branch
      %121 = sbr.rel (0) target = $region25
    $region24: #{tpu_custom_call.1} parent=1 // pred_region
      %122 = dma.done [#allocation4], 64
    $region25: #{tpu_custom_call.1} parent=1 // pred_fallthru
      _
    %123 = vsyncpa [#allocation3], 1
    %124 = vsyncpa [#allocation6], 1
    %125 = vsyncpa [#allocation4], 1

</llo_original>
